<compile_context>
chip_gen: v7x
topology: tpu7x:2x2x1
jax: 0.10.0
libtpu: 0.0.40
codegen_flags: <defaults>
</compile_context>

<pallas_src>
import functools

import jax
import jax.numpy as jnp
from jax.experimental import pallas as pl
from jax.experimental.pallas import tpu as pltpu


def _round_up(n: int, m: int) -> int:
    return ((n + m - 1) // m) * m


def _mlp_kernel(*refs, n_layers: int):
    # refs = (x_ref, w0, b0, w1, b1, ..., o_ref)
    x_ref = refs[0]
    o_ref = refs[-1]
    params = refs[1:-1]

    h = x_ref[...].astype(jnp.float32)            # (bm, P_in), stays in vregs
    for li in range(n_layers):
        w_ref = params[2 * li]                    # (P_in_li, P_out_li)
        b_ref = params[2 * li + 1]                # (1, P_out_li)
        h = jnp.dot(h, w_ref[...], preferred_element_type=jnp.float32) + b_ref[...]
        if li != n_layers - 1:                    # Tanh after every layer except the last
            h = jnp.tanh(h)
    o_ref[...] = h.astype(o_ref.dtype)            # lane-dense (bm, 128k) store


def mlp_forward_fused(params, x, *, max_bm: int = 256):
    """Fused MLP forward: x (B, in_dim) -> (B, out_dim). params = [(W_i, b_i)]."""
    B, in_dim = x.shape
    n_layers = len(params)

    dims = [in_dim] + [w.shape[1] for (w, _) in params]
    pdims = [_round_up(d, 128) for d in dims]     # lane-dense padded feature dims

    # Zero-pad weights/biases once in the wrapper (layout plumbing, tiny arrays).
    flat_inputs = []
    in_specs = []

    # Batch tiling: whole (sublane-padded) batch for small B, else 256-row tiles.
    bm = min(_round_up(B, 8), max_bm)
    B_pad = _round_up(B, bm)
    x_pad = jnp.zeros((B_pad, pdims[0]), jnp.float32).at[:B, :in_dim].set(x)

    flat_inputs.append(x_pad)
    in_specs.append(pl.BlockSpec((bm, pdims[0]), lambda i: (i, 0)))

    for li, (w, b) in enumerate(params):
        pi, po = pdims[li], pdims[li + 1]
        w_pad = jnp.zeros((pi, po), jnp.float32).at[: w.shape[0], : w.shape[1]].set(w)
        b_pad = jnp.zeros((1, po), jnp.float32).at[0, : b.shape[0]].set(b)
        flat_inputs += [w_pad, b_pad]
        # Full weight / bias block, constant index_map -> VMEM-resident across grid steps.
        in_specs.append(pl.BlockSpec((pi, po), lambda i: (0, 0)))
        in_specs.append(pl.BlockSpec((1, po), lambda i: (0, 0)))

    out_spec = pl.BlockSpec((bm, pdims[-1]), lambda i: (i, 0))

    kernel = functools.partial(_mlp_kernel, n_layers=n_layers)

    out_pad = pl.pallas_call(
        kernel,
        out_shape=jax.ShapeDtypeStruct((B_pad, pdims[-1]), jnp.float32),
        grid_spec=pltpu.PrefetchScalarGridSpec(
            num_scalar_prefetch=0,
            grid=(B_pad // bm,),
            in_specs=in_specs,
            out_specs=out_spec,
        ),
        compiler_params=pltpu.CompilerParams(
            dimension_semantics=("parallel",),   # megacore can split the batch axis
        ),
    )(*flat_inputs)

    # Strip batch + feature padding.
    return out_pad[:B, : dims[-1]]


def init_mlp_params(layers, key):
    """Deterministic PyTorch-style (uniform +/- 1/sqrt(fan_in)) initialization."""
    params = []
    for i in range(len(layers) - 1):
        fan_in, fan_out = layers[i], layers[i + 1]
        key, kw, kb = jax.random.split(key, 3)
        bound = 1.0 / jnp.sqrt(fan_in)
        # stored as (in, out) — transpose of PyTorch's (out, in)
        w = jax.random.uniform(kw, (fan_in, fan_out), jnp.float32, -bound, bound)
        b = jax.random.uniform(kb, (fan_out,), jnp.float32, -bound, bound)
        params.append((w, b))
    return params


if __name__ == "__main__":
    # HJB-Rosenbrock style MLP: input dim 4 -> 32 -> 32 -> 1
    layers = [4, 32, 32, 1]
    batch = 16

    key = jax.random.PRNGKey(0)
    key, kx = jax.random.split(key)
    x = jax.random.normal(kx, (batch, layers[0]), jnp.float32)

    params = init_mlp_params(layers, key)

    out = mlp_forward_fused(params, x)
    out = jax.block_until_ready(out)

    # Pure-JAX reference for a sanity check.
    def ref_forward(params, x):
        h = x
        for i, (w, b) in enumerate(params):
            h = h @ w + b
            if i != len(params) - 1:
                h = jnp.tanh(h)
        return h

    ref = ref_forward(params, x)
    assert out.shape == (batch, layers[-1])
    assert jnp.allclose(out, ref, atol=1e-5, rtol=1e-5)

    print("KERNEL_OK")
</pallas_src>

<mosaic_0001>
module attributes {stable_mosaic.version = 11 : i64} {
  func.func @_mlp_kernel(%arg0: i32, %arg1: memref<16x128xf32, #tpu.memory_space<vmem>>, %arg2: memref<128x128xf32, #tpu.memory_space<vmem>>, %arg3: memref<1x128xf32, #tpu.memory_space<vmem>>, %arg4: memref<128x128xf32, #tpu.memory_space<vmem>>, %arg5: memref<1x128xf32, #tpu.memory_space<vmem>>, %arg6: memref<128x128xf32, #tpu.memory_space<vmem>>, %arg7: memref<1x128xf32, #tpu.memory_space<vmem>>, %arg8: memref<16x128xf32, #tpu.memory_space<vmem>>) attributes {dimension_semantics = [#tpu.dimension_semantics<parallel>], iteration_bounds = array<i64: 1>, scalar_prefetch = 0 : i64, scratch_operands = 0 : i64, tpu.core_type = #tpu.core_type<tc>, window_params = [{transform_indices = @transform_0, window_bounds = array<i64: 16, 128>}, {pipeline_mode = #tpu.pipeline_mode<synchronous>, transform_indices = @transform_1, window_bounds = array<i64: 128, 128>}, {pipeline_mode = #tpu.pipeline_mode<synchronous>, transform_indices = @transform_2, window_bounds = array<i64: 1, 128>}, {pipeline_mode = #tpu.pipeline_mode<synchronous>, transform_indices = @transform_3, window_bounds = array<i64: 128, 128>}, {pipeline_mode = #tpu.pipeline_mode<synchronous>, transform_indices = @transform_4, window_bounds = array<i64: 1, 128>}, {pipeline_mode = #tpu.pipeline_mode<synchronous>, transform_indices = @transform_5, window_bounds = array<i64: 128, 128>}, {pipeline_mode = #tpu.pipeline_mode<synchronous>, transform_indices = @transform_6, window_bounds = array<i64: 1, 128>}, {transform_indices = @transform_7, window_bounds = array<i64: 16, 128>}]} {
    %c0 = arith.constant 0 : index
    %c0_0 = arith.constant 0 : index
    %0 = vector.load %arg1[%c0, %c0_0] : memref<16x128xf32, #tpu.memory_space<vmem>>, vector<16x128xf32>
    %c0_1 = arith.constant 0 : index
    %c0_2 = arith.constant 0 : index
    %1 = vector.load %arg2[%c0_1, %c0_2] : memref<128x128xf32, #tpu.memory_space<vmem>>, vector<128x128xf32>
    %cst = arith.constant dense<0.000000e+00> : vector<16x128xf32>
    %2 = tpu.matmul %0, %1, %cst {dimension_numbers = #tpu.dot_dimension_numbers<[1], [0], [0], [1], [0, 0, 1, 1], [], []>} : vector<16x128xf32>, vector<128x128xf32>, vector<16x128xf32> -> vector<16x128xf32>
    %c0_3 = arith.constant 0 : index
    %c0_4 = arith.constant 0 : index
    %3 = vector.load %arg3[%c0_3, %c0_4] : memref<1x128xf32, #tpu.memory_space<vmem>>, vector<1x128xf32>
    %4 = vector.broadcast %3 : vector<1x128xf32> to vector<16x128xf32>
    %5 = arith.addf %2, %4 : vector<16x128xf32>
    %6 = math.tanh %5 : vector<16x128xf32>
    %c0_5 = arith.constant 0 : index
    %c0_6 = arith.constant 0 : index
    %7 = vector.load %arg4[%c0_5, %c0_6] : memref<128x128xf32, #tpu.memory_space<vmem>>, vector<128x128xf32>
    %cst_7 = arith.constant dense<0.000000e+00> : vector<16x128xf32>
    %8 = tpu.matmul %6, %7, %cst_7 {dimension_numbers = #tpu.dot_dimension_numbers<[1], [0], [0], [1], [0, 0, 1, 1], [], []>} : vector<16x128xf32>, vector<128x128xf32>, vector<16x128xf32> -> vector<16x128xf32>
    %c0_8 = arith.constant 0 : index
    %c0_9 = arith.constant 0 : index
    %9 = vector.load %arg5[%c0_8, %c0_9] : memref<1x128xf32, #tpu.memory_space<vmem>>, vector<1x128xf32>
    %10 = vector.broadcast %9 : vector<1x128xf32> to vector<16x128xf32>
    %11 = arith.addf %8, %10 : vector<16x128xf32>
    %12 = math.tanh %11 : vector<16x128xf32>
    %c0_10 = arith.constant 0 : index
    %c0_11 = arith.constant 0 : index
    %13 = vector.load %arg6[%c0_10, %c0_11] : memref<128x128xf32, #tpu.memory_space<vmem>>, vector<128x128xf32>
    %cst_12 = arith.constant dense<0.000000e+00> : vector<16x128xf32>
    %14 = tpu.matmul %12, %13, %cst_12 {dimension_numbers = #tpu.dot_dimension_numbers<[1], [0], [0], [1], [0, 0, 1, 1], [], []>} : vector<16x128xf32>, vector<128x128xf32>, vector<16x128xf32> -> vector<16x128xf32>
    %c0_13 = arith.constant 0 : index
    %c0_14 = arith.constant 0 : index
    %15 = vector.load %arg7[%c0_13, %c0_14] : memref<1x128xf32, #tpu.memory_space<vmem>>, vector<1x128xf32>
    %16 = vector.broadcast %15 : vector<1x128xf32> to vector<16x128xf32>
    %17 = arith.addf %14, %16 : vector<16x128xf32>
    %c0_15 = arith.constant 0 : index
    %c0_16 = arith.constant 0 : index
    %18 = vector.load %arg8[%c0_15, %c0_16] : memref<16x128xf32, #tpu.memory_space<vmem>>, vector<16x128xf32>
    tpu.vector_store %arg8[%c0_15, %c0_16], %17 {strides = array<i32>} : memref<16x128xf32, #tpu.memory_space<vmem>>, vector<16x128xf32>,
    return
  }
  func.func @transform_0(%arg0: i32) -> (i32, i32) {
    %c0_i32 = arith.constant 0 : i32
    %c0_i32_0 = arith.constant 0 : i32
    return %arg0, %c0_i32 : i32, i32
  }
  func.func @transform_1(%arg0: i32) -> (i32, i32) {
    %c0_i32 = arith.constant 0 : i32
    %c0_i32_0 = arith.constant 0 : i32
    %c0_i32_1 = arith.constant 0 : i32
    return %c0_i32, %c0_i32_0 : i32, i32
  }
  func.func @transform_2(%arg0: i32) -> (i32, i32) {
    %c0_i32 = arith.constant 0 : i32
    %c0_i32_0 = arith.constant 0 : i32
    %c0_i32_1 = arith.constant 0 : i32
    return %c0_i32, %c0_i32_0 : i32, i32
  }
  func.func @transform_3(%arg0: i32) -> (i32, i32) {
    %c0_i32 = arith.constant 0 : i32
    %c0_i32_0 = arith.constant 0 : i32
    %c0_i32_1 = arith.constant 0 : i32
    return %c0_i32, %c0_i32_0 : i32, i32
  }
  func.func @transform_4(%arg0: i32) -> (i32, i32) {
    %c0_i32 = arith.constant 0 : i32
    %c0_i32_0 = arith.constant 0 : i32
    %c0_i32_1 = arith.constant 0 : i32
    return %c0_i32, %c0_i32_0 : i32, i32
  }
  func.func @transform_5(%arg0: i32) -> (i32, i32) {
    %c0_i32 = arith.constant 0 : i32
    %c0_i32_0 = arith.constant 0 : i32
    %c0_i32_1 = arith.constant 0 : i32
    return %c0_i32, %c0_i32_0 : i32, i32
  }
  func.func @transform_6(%arg0: i32) -> (i32, i32) {
    %c0_i32 = arith.constant 0 : i32
    %c0_i32_0 = arith.constant 0 : i32
    %c0_i32_1 = arith.constant 0 : i32
    return %c0_i32, %c0_i32_0 : i32, i32
  }
  func.func @transform_7(%arg0: i32) -> (i32, i32) {
    %c0_i32 = arith.constant 0 : i32
    %c0_i32_0 = arith.constant 0 : i32
    return %arg0, %c0_i32 : i32, i32
  }
}

</mosaic_0001>

<llo_original>
// kernel: tpu_custom_call.1
$region0: #{tpu_custom_call.1}
  #allocation0 [shape = 'u32[]', space=smem, size = 0x4, offset = 0x4, fixed_abs, tag = 'smem constant byte address 0x4 - core index']
  #allocation1 [shape = 'u32[144,128]{1,0:T(1,128)}', space=vmem, size = 0x12000, scoped, tag = 'internal scratch']
  %s0 = inlined_call_operand.hbm [shape: f32[16,128], index: 0, kind: input, shape index: {}]
  %s1 = inlined_call_operand.hbm [shape: f32[128,128], index: 1, kind: input, shape index: {}]
  %s2 = inlined_call_operand.vmem [shape: f32[1,128], index: 2, kind: input, shape index: {}]
  %s3 = inlined_call_operand.hbm [shape: f32[128,128], index: 3, kind: input, shape index: {}]
  %s4 = inlined_call_operand.vmem [shape: f32[1,128], index: 4, kind: input, shape index: {}]
  %s5 = inlined_call_operand.hbm [shape: f32[128,128], index: 5, kind: input, shape index: {}]
  %s6 = inlined_call_operand.vmem [shape: f32[1,128], index: 6, kind: input, shape index: {}]
  %s7 = inlined_call_operand.hbm [shape: f32[16,128], index: 7, kind: output, shape index: {}]
  %s8 = sld [smem:[#allocation0]]
  $region54: #{tpu_custom_call.1} parent=0
    _
  %s10 = ssub.s32 1, %s8
  %s11 = scalar_select 0, %s10, %s8
  $region1: #{tpu_custom_call.1} parent=0
    #allocation2 [shape = 'u8[8192]{0}', space=vmem, size = 0x2000, scoped, tag = 'input window, operand 0, single buffered']
    #allocation3 [shape = 's32[1]{0}', space=sflag, size = 0x4, scoped, tag = 'scoped memory for tpu_custom_call.1']
    #allocation4 [shape = 's32[1]{0}', space=sflag, size = 0x4, scoped, tag = 'scoped memory for tpu_custom_call.1']
    #allocation5 [shape = 'u8[65536]{0}', space=vmem, size = 0x10000, scoped, tag = 'input window, operand 1, single buffered']
    #allocation6 [shape = 's32[1]{0}', space=sflag, size = 0x4, scoped, tag = 'scoped memory for tpu_custom_call.1']
    #allocation7 [shape = 'u8[65536]{0}', space=vmem, size = 0x10000, scoped, tag = 'input window, operand 3, single buffered']
    #allocation8 [shape = 'u8[65536]{0}', space=vmem, size = 0x10000, scoped, tag = 'input window, operand 5, single buffered']
    #allocation9 [shape = 's32[1]{0}', space=sflag, size = 0x4, scoped, tag = 'scoped memory for tpu_custom_call.1']
    #allocation10 [shape = 'u8[8192]{0}', space=vmem, size = 0x2000, scoped, tag = 'output window, operand 0, single buffered']
    %12 = vsyncpa [#allocation3], 0
    %13 = vsyncpa [#allocation6], 0
    %14 = vsyncpa [#allocation9], 0
    %15 = vsyncpa [#allocation4], 0
    // Predicated region
    $region2: #{tpu_custom_call.1} parent=1 // pred_check
      _
    $region3: #{tpu_custom_call.1} parent=1 // pred_check_branch
      %17 = sbr.rel (0) target = $region5
    $region4: #{tpu_custom_call.1} parent=1 // pred_region
      %s19 = ssub.s32 256, 256
      %20 = vsyncadd [#allocation3], %s19
      %s21 = sshll.u32 [#allocation2], 4
      %s22 = int_to_ptr.vmem [resolvable:$true] %s21
      %27 = dma.hbm_to_vmem [thread:$0]  %s0, 256, %s22, [#allocation3], 128, 128, 8
    $region5: #{tpu_custom_call.1} parent=1 // pred_fallthru
      _
    // Predicated region
    $region6: #{tpu_custom_call.1} parent=1 // pred_check
      _
    $region7: #{tpu_custom_call.1} parent=1 // pred_check_branch
      %29 = sbr.rel (0) target = $region9
    $region8: #{tpu_custom_call.1} parent=1 // pred_region
      %s31 = ssub.s32 2048, 2048
      %32 = vsyncadd [#allocation6], %s31
      %s33 = sshll.u32 [#allocation5], 4
      %s34 = int_to_ptr.vmem [resolvable:$true] %s33
      %39 = dma.hbm_to_vmem [thread:$0]  %s1, 2048, %s34, [#allocation6], 128, 128, 8
    $region9: #{tpu_custom_call.1} parent=1 // pred_fallthru
      _
    // Predicated region
    $region10: #{tpu_custom_call.1} parent=1 // pred_check
      _
    $region11: #{tpu_custom_call.1} parent=1 // pred_check_branch
      %41 = sbr.rel (0) target = $region13
    $region12: #{tpu_custom_call.1} parent=1 // pred_region
      _
    $region13: #{tpu_custom_call.1} parent=1 // pred_fallthru
      _
    // Predicated region
    $region14: #{tpu_custom_call.1} parent=1 // pred_check
      _
    $region15: #{tpu_custom_call.1} parent=1 // pred_check_branch
      %43 = sbr.rel (0) target = $region17
    $region16: #{tpu_custom_call.1} parent=1 // pred_region
      %s45 = ssub.s32 2048, 2048
      %46 = vsyncadd [#allocation6], %s45
      %s47 = sshll.u32 [#allocation7], 4
      %s48 = int_to_ptr.vmem [resolvable:$true] %s47
      %53 = dma.hbm_to_vmem [thread:$0]  %s3, 2048, %s48, [#allocation6], 128, 128, 8
    $region17: #{tpu_custom_call.1} parent=1 // pred_fallthru
      _
    // Predicated region
    $region18: #{tpu_custom_call.1} parent=1 // pred_check
      _
    $region19: #{tpu_custom_call.1} parent=1 // pred_check_branch
      %55 = sbr.rel (0) target = $region21
    $region20: #{tpu_custom_call.1} parent=1 // pred_region
      _
    $region21: #{tpu_custom_call.1} parent=1 // pred_fallthru
      _
    // Predicated region
    $region22: #{tpu_custom_call.1} parent=1 // pred_check
      _
    $region23: #{tpu_custom_call.1} parent=1 // pred_check_branch
      %57 = sbr.rel (0) target = $region25
    $region24: #{tpu_custom_call.1} parent=1 // pred_region
      %s59 = ssub.s32 2048, 2048
      %60 = vsyncadd [#allocation9], %s59
      %s61 = sshll.u32 [#allocation8], 4
      %s62 = int_to_ptr.vmem [resolvable:$true] %s61
      %67 = dma.hbm_to_vmem [thread:$0]  %s5, 2048, %s62, [#allocation9], 128, 128, 8
    $region25: #{tpu_custom_call.1} parent=1 // pred_fallthru
      _
    // Predicated region
    $region26: #{tpu_custom_call.1} parent=1 // pred_check
      _
    $region27: #{tpu_custom_call.1} parent=1 // pred_check_branch
      %69 = sbr.rel (0) target = $region29
    $region28: #{tpu_custom_call.1} parent=1 // pred_region
      _
    $region29: #{tpu_custom_call.1} parent=1 // pred_fallthru
      _
    // Predicated region
    $region30: #{tpu_custom_call.1} parent=1 // pred_check
      _
    $region31: #{tpu_custom_call.1} parent=1 // pred_check_branch
      %71 = sbr.rel (0) target = $region33
    $region32: #{tpu_custom_call.1} parent=1 // pred_region
      %72 = dma.done [#allocation3], 256
    $region33: #{tpu_custom_call.1} parent=1 // pred_fallthru
      _
    // Predicated region
    $region34: #{tpu_custom_call.1} parent=1 // pred_check
      _
    $region35: #{tpu_custom_call.1} parent=1 // pred_check_branch
      %74 = sbr.rel (0) target = $region37
    $region36: #{tpu_custom_call.1} parent=1 // pred_region
      %75 = dma.done [#allocation6], 2048
    $region37: #{tpu_custom_call.1} parent=1 // pred_fallthru
      _
    // Predicated region
    $region38: #{tpu_custom_call.1} parent=1 // pred_check
      _
    $region39: #{tpu_custom_call.1} parent=1 // pred_check_branch
      %77 = sbr.rel (0) target = $region41
    $region40: #{tpu_custom_call.1} parent=1 // pred_region
      %78 = dma.done [#allocation6], 2048
    $region41: #{tpu_custom_call.1} parent=1 // pred_fallthru
      _
    // Predicated region
    $region42: #{tpu_custom_call.1} parent=1 // pred_check
      _
    $region43: #{tpu_custom_call.1} parent=1 // pred_check_branch
      %80 = sbr.rel (0) target = $region45
    $region44: #{tpu_custom_call.1} parent=1 // pred_region
      %81 = dma.done [#allocation9], 2048
    $region45: #{tpu_custom_call.1} parent=1 // pred_fallthru
      _
    %v82 = vld [vmem:[#allocation2] sm:$0xff]
    %v83 = vld [vmem:[#allocation2 + $0x8] sm:$0xff]
    %v84 = vld [vmem:[#allocation5] sm:$0xff]
    %v85 = vld [vmem:[#allocation5 + $0x8] sm:$0xff]
    %v86 = vld [vmem:[#allocation5 + $0x10] sm:$0xff]
    %v87 = vld [vmem:[#allocation5 + $0x18] sm:$0xff]
    %v88 = vld [vmem:[#allocation5 + $0x20] sm:$0xff]
    %v89 = vld [vmem:[#allocation5 + $0x28] sm:$0xff]
    %v90 = vld [vmem:[#allocation5 + $0x30] sm:$0xff]
    %v91 = vld [vmem:[#allocation5 + $0x38] sm:$0xff]
    %v92 = vld [vmem:[#allocation5 + $0x40] sm:$0xff]
    %v93 = vld [vmem:[#allocation5 + $0x48] sm:$0xff]
    %v94 = vld [vmem:[#allocation5 + $0x50] sm:$0xff]
    %v95 = vld [vmem:[#allocation5 + $0x58] sm:$0xff]
    %v96 = vld [vmem:[#allocation5 + $0x60] sm:$0xff]
    %v97 = vld [vmem:[#allocation5 + $0x68] sm:$0xff]
    %v98 = vld [vmem:[#allocation5 + $0x70] sm:$0xff]
    %v99 = vld [vmem:[#allocation5 + $0x78] sm:$0xff]
    %v100 = vld [vmem:[%s2] sm:$0x1]
    %v102 = vlaneseq
    %v103 = vshrl.u32 %v102, 7
    %v104 = vsub.s32 0, %v103
    %v105 = vrot.slane %v100, %v104
    %107 = vmatprep.subr.mxu0 0.0
    %108 = vmatpush1.msra.mxu0 %v84
    %109 = vmatprep.subr.mxu0 0.0
    %110 = vmatpush1.msra.mxu0 %v85
    %111 = vmatprep.subr.mxu0 0.0
    %112 = vmatpush1.msra.mxu0 %v86
    %113 = vmatprep.subr.mxu0 0.0
    %114 = vmatpush1.msra.mxu0 %v87
    %115 = vmatprep.subr.mxu0 0.0
    %116 = vmatpush1.msra.mxu0 %v88
    %117 = vmatprep.subr.mxu0 0.0
    %118 = vmatpush1.msra.mxu0 %v89
    %119 = vmatprep.subr.mxu0 0.0
    %120 = vmatpush1.msra.mxu0 %v90
    %121 = vmatprep.subr.mxu0 0.0
    %122 = vmatpush1.msra.mxu0 %v91
    %123 = vmatprep.subr.mxu0 0.0
    %124 = vmatpush1.msra.mxu0 %v92
    %125 = vmatprep.subr.mxu0 0.0
    %126 = vmatpush1.msra.mxu0 %v93
    %127 = vmatprep.subr.mxu0 0.0
    %128 = vmatpush1.msra.mxu0 %v94
    %129 = vmatprep.subr.mxu0 0.0
    %130 = vmatpush1.msra.mxu0 %v95
    %131 = vmatprep.subr.mxu0 0.0
    %132 = vmatpush1.msra.mxu0 %v96
    %133 = vmatprep.subr.mxu0 0.0
    %134 = vmatpush1.msra.mxu0 %v97
    %135 = vmatprep.subr.mxu0 0.0
    %136 = vmatpush1.msra.mxu0 %v98
    %137 = vmatprep.subr.mxu0 0.0
    %138 = vmatpush1.msra.mxu0 %v99
    %139 = vmatprep.subr.mxu0 0.0
    %140 = vmatpush1.msra.mxu0 0.0
    %141 = vmatprep.subr.mxu0 0.0
    %142 = vmatpush1.msra.mxu0 0.0
    %143 = vmatprep.subr.mxu0 0.0
    %144 = vmatpush1.msra.mxu0 0.0
    %145 = vmatprep.subr.mxu0 0.0
    %146 = vmatpush1.msra.mxu0 0.0
    %147 = vmatprep.subr.mxu0 0.0
    %148 = vmatpush1.msra.mxu0 0.0
    %149 = vmatprep.subr.mxu0 0.0
    %150 = vmatpush1.msra.mxu0 0.0
    %151 = vmatprep.subr.mxu0 0.0
    %152 = vmatpush1.msra.mxu0 0.0
    %153 = vmatprep.subr.mxu0 0.0
    %154 = vmatpush1.msra.mxu0 0.0
    %155 = vmatprep.subr.mxu0 0.0
    %156 = vmatpush1.msra.mxu0 0.0
    %157 = vmatprep.subr.mxu0 0.0
    %158 = vmatpush1.msra.mxu0 0.0
    %159 = vmatprep.subr.mxu0 0.0
    %160 = vmatpush1.msra.mxu0 0.0
    %161 = vmatprep.subr.mxu0 0.0
    %162 = vmatpush1.msra.mxu0 0.0
    %163 = vmatprep.subr.mxu0 0.0
    %164 = vmatpush1.msra.mxu0 0.0
    %165 = vmatprep.subr.mxu0 0.0
    %166 = vmatpush1.msra.mxu0 0.0
    %167 = vmatprep.subr.mxu0 0.0
    %168 = vmatpush1.msra.mxu0 0.0
    %169 = vmatprep.subr.mxu0 0.0
    %170 = vmatpush1.msra.mxu0 0.0
    %171 = vmatprep.mubr.f32.mxu0 0.0
    %172 = vmatmul.mubr.f32.gmra.mrb[0].mxu0 %v82
    %v173 = vpop.f32.mrb[0].mxu0
    %v174 = vadd.f32 %v105, %v173
    %v175 = vpop.f32.mrb[0].mxu0
    %176 = vmatprep.mubr.f32.mxu0 0.0
    %177 = vmatmul.mubr.f32.gmra.mrb[0].mxu0 %v83
    %v178 = vpop.f32.mrb[0].mxu0
    %v179 = vadd.f32 %v105, %v178
    %v180 = vpop.f32.mrb[0].mxu0
    %181 = vdwg.mxu0
    %v182 = vtanh.pop %v174
    %v183 = vtanh.pop %v179
    %v184 = vld [vmem:[#allocation7] sm:$0xff]
    %v185 = vld [vmem:[#allocation7 + $0x8] sm:$0xff]
    %v186 = vld [vmem:[#allocation7 + $0x10] sm:$0xff]
    %v187 = vld [vmem:[#allocation7 + $0x18] sm:$0xff]
    %v188 = vld [vmem:[#allocation7 + $0x20] sm:$0xff]
    %v189 = vld [vmem:[#allocation7 + $0x28] sm:$0xff]
    %v190 = vld [vmem:[#allocation7 + $0x30] sm:$0xff]
    %v191 = vld [vmem:[#allocation7 + $0x38] sm:$0xff]
    %v192 = vld [vmem:[#allocation7 + $0x40] sm:$0xff]
    %v193 = vld [vmem:[#allocation7 + $0x48] sm:$0xff]
    %v194 = vld [vmem:[#allocation7 + $0x50] sm:$0xff]
    %v195 = vld [vmem:[#allocation7 + $0x58] sm:$0xff]
    %v196 = vld [vmem:[#allocation7 + $0x60] sm:$0xff]
    %v197 = vld [vmem:[#allocation7 + $0x68] sm:$0xff]
    %v198 = vld [vmem:[#allocation7 + $0x70] sm:$0xff]
    %v199 = vld [vmem:[#allocation7 + $0x78] sm:$0xff]
    %v200 = vld [vmem:[%s4] sm:$0x1]
    %v202 = vlaneseq
    %v203 = vshrl.u32 %v202, 7
    %v204 = vsub.s32 0, %v203
    %v205 = vrot.slane %v200, %v204
    %207 = vmatprep.subr.mxu0 0.0
    %208 = vmatpush1.msra.mxu0 %v184
    %209 = vmatprep.subr.mxu0 0.0
    %210 = vmatpush1.msra.mxu0 %v185
    %211 = vmatprep.subr.mxu0 0.0
    %212 = vmatpush1.msra.mxu0 %v186
    %213 = vmatprep.subr.mxu0 0.0
    %214 = vmatpush1.msra.mxu0 %v187
    %215 = vmatprep.subr.mxu0 0.0
    %216 = vmatpush1.msra.mxu0 %v188
    %217 = vmatprep.subr.mxu0 0.0
    %218 = vmatpush1.msra.mxu0 %v189
    %219 = vmatprep.subr.mxu0 0.0
    %220 = vmatpush1.msra.mxu0 %v190
    %221 = vmatprep.subr.mxu0 0.0
    %222 = vmatpush1.msra.mxu0 %v191
    %223 = vmatprep.subr.mxu0 0.0
    %224 = vmatpush1.msra.mxu0 %v192
    %225 = vmatprep.subr.mxu0 0.0
    %226 = vmatpush1.msra.mxu0 %v193
    %227 = vmatprep.subr.mxu0 0.0
    %228 = vmatpush1.msra.mxu0 %v194
    %229 = vmatprep.subr.mxu0 0.0
    %230 = vmatpush1.msra.mxu0 %v195
    %231 = vmatprep.subr.mxu0 0.0
    %232 = vmatpush1.msra.mxu0 %v196
    %233 = vmatprep.subr.mxu0 0.0
    %234 = vmatpush1.msra.mxu0 %v197
    %235 = vmatprep.subr.mxu0 0.0
    %236 = vmatpush1.msra.mxu0 %v198
    %237 = vmatprep.subr.mxu0 0.0
    %238 = vmatpush1.msra.mxu0 %v199
    %239 = vmatprep.subr.mxu0 0.0
    %240 = vmatpush1.msra.mxu0 0.0
    %241 = vmatprep.subr.mxu0 0.0
    %242 = vmatpush1.msra.mxu0 0.0
    %243 = vmatprep.subr.mxu0 0.0
    %244 = vmatpush1.msra.mxu0 0.0
    %245 = vmatprep.subr.mxu0 0.0
    %246 = vmatpush1.msra.mxu0 0.0
    %247 = vmatprep.subr.mxu0 0.0
    %248 = vmatpush1.msra.mxu0 0.0
    %249 = vmatprep.subr.mxu0 0.0
    %250 = vmatpush1.msra.mxu0 0.0
    %251 = vmatprep.subr.mxu0 0.0
    %252 = vmatpush1.msra.mxu0 0.0
    %253 = vmatprep.subr.mxu0 0.0
    %254 = vmatpush1.msra.mxu0 0.0
    %255 = vmatprep.subr.mxu0 0.0
    %256 = vmatpush1.msra.mxu0 0.0
    %257 = vmatprep.subr.mxu0 0.0
    %258 = vmatpush1.msra.mxu0 0.0
    %259 = vmatprep.subr.mxu0 0.0
    %260 = vmatpush1.msra.mxu0 0.0
    %261 = vmatprep.subr.mxu0 0.0
    %262 = vmatpush1.msra.mxu0 0.0
    %263 = vmatprep.subr.mxu0 0.0
    %264 = vmatpush1.msra.mxu0 0.0
    %265 = vmatprep.subr.mxu0 0.0
    %266 = vmatpush1.msra.mxu0 0.0
    %267 = vmatprep.subr.mxu0 0.0
    %268 = vmatpush1.msra.mxu0 0.0
    %269 = vmatprep.subr.mxu0 0.0
    %270 = vmatpush1.msra.mxu0 0.0
    %271 = vmatprep.mubr.f32.mxu0 0.0
    %272 = vmatmul.mubr.f32.gmra.mrb[0].mxu0 %v182
    %v273 = vpop.f32.mrb[0].mxu0
    %v274 = vadd.f32 %v205, %v273
    %v275 = vpop.f32.mrb[0].mxu0
    %276 = vmatprep.mubr.f32.mxu0 0.0
    %277 = vmatmul.mubr.f32.gmra.mrb[0].mxu0 %v183
    %v278 = vpop.f32.mrb[0].mxu0
    %v279 = vadd.f32 %v205, %v278
    %v280 = vpop.f32.mrb[0].mxu0
    %281 = vdwg.mxu0
    %v282 = vtanh.pop %v274
    %v283 = vtanh.pop %v279
    %v284 = vld [vmem:[#allocation8] sm:$0xff]
    %v285 = vld [vmem:[#allocation8 + $0x8] sm:$0xff]
    %v286 = vld [vmem:[#allocation8 + $0x10] sm:$0xff]
    %v287 = vld [vmem:[#allocation8 + $0x18] sm:$0xff]
    %v288 = vld [vmem:[#allocation8 + $0x20] sm:$0xff]
    %v289 = vld [vmem:[#allocation8 + $0x28] sm:$0xff]
    %v290 = vld [vmem:[#allocation8 + $0x30] sm:$0xff]
    %v291 = vld [vmem:[#allocation8 + $0x38] sm:$0xff]
    %v292 = vld [vmem:[#allocation8 + $0x40] sm:$0xff]
    %v293 = vld [vmem:[#allocation8 + $0x48] sm:$0xff]
    %v294 = vld [vmem:[#allocation8 + $0x50] sm:$0xff]
    %v295 = vld [vmem:[#allocation8 + $0x58] sm:$0xff]
    %v296 = vld [vmem:[#allocation8 + $0x60] sm:$0xff]
    %v297 = vld [vmem:[#allocation8 + $0x68] sm:$0xff]
    %v298 = vld [vmem:[#allocation8 + $0x70] sm:$0xff]
    %v299 = vld [vmem:[#allocation8 + $0x78] sm:$0xff]
    %v300 = vld [vmem:[%s6] sm:$0x1]
    %v302 = vlaneseq
    %v303 = vshrl.u32 %v302, 7
    %v304 = vsub.s32 0, %v303
    %v305 = vrot.slane %v300, %v304
    %307 = vmatprep.subr.mxu0 0.0
    %308 = vmatpush1.msra.mxu0 %v284
    %309 = vmatprep.subr.mxu0 0.0
    %310 = vmatpush1.msra.mxu0 %v285
    %311 = vmatprep.subr.mxu0 0.0
    %312 = vmatpush1.msra.mxu0 %v286
    %313 = vmatprep.subr.mxu0 0.0
    %314 = vmatpush1.msra.mxu0 %v287
    %315 = vmatprep.subr.mxu0 0.0
    %316 = vmatpush1.msra.mxu0 %v288
    %317 = vmatprep.subr.mxu0 0.0
    %318 = vmatpush1.msra.mxu0 %v289
    %319 = vmatprep.subr.mxu0 0.0
    %320 = vmatpush1.msra.mxu0 %v290
    %321 = vmatprep.subr.mxu0 0.0
    %322 = vmatpush1.msra.mxu0 %v291
    %323 = vmatprep.subr.mxu0 0.0
    %324 = vmatpush1.msra.mxu0 %v292
    %325 = vmatprep.subr.mxu0 0.0
    %326 = vmatpush1.msra.mxu0 %v293
    %327 = vmatprep.subr.mxu0 0.0
    %328 = vmatpush1.msra.mxu0 %v294
    %329 = vmatprep.subr.mxu0 0.0
    %330 = vmatpush1.msra.mxu0 %v295
    %331 = vmatprep.subr.mxu0 0.0
    %332 = vmatpush1.msra.mxu0 %v296
    %333 = vmatprep.subr.mxu0 0.0
    %334 = vmatpush1.msra.mxu0 %v297
    %335 = vmatprep.subr.mxu0 0.0
    %336 = vmatpush1.msra.mxu0 %v298
    %337 = vmatprep.subr.mxu0 0.0
    %338 = vmatpush1.msra.mxu0 %v299
    %339 = vmatprep.subr.mxu0 0.0
    %340 = vmatpush1.msra.mxu0 0.0
    %341 = vmatprep.subr.mxu0 0.0
    %342 = vmatpush1.msra.mxu0 0.0
    %343 = vmatprep.subr.mxu0 0.0
    %344 = vmatpush1.msra.mxu0 0.0
    %345 = vmatprep.subr.mxu0 0.0
    %346 = vmatpush1.msra.mxu0 0.0
    %347 = vmatprep.subr.mxu0 0.0
    %348 = vmatpush1.msra.mxu0 0.0
    %349 = vmatprep.subr.mxu0 0.0
    %350 = vmatpush1.msra.mxu0 0.0
    %351 = vmatprep.subr.mxu0 0.0
    %352 = vmatpush1.msra.mxu0 0.0
    %353 = vmatprep.subr.mxu0 0.0
    %354 = vmatpush1.msra.mxu0 0.0
    %355 = vmatprep.subr.mxu0 0.0
    %356 = vmatpush1.msra.mxu0 0.0
    %357 = vmatprep.subr.mxu0 0.0
    %358 = vmatpush1.msra.mxu0 0.0
    %359 = vmatprep.subr.mxu0 0.0
    %360 = vmatpush1.msra.mxu0 0.0
    %361 = vmatprep.subr.mxu0 0.0
    %362 = vmatpush1.msra.mxu0 0.0
    %363 = vmatprep.subr.mxu0 0.0
    %364 = vmatpush1.msra.mxu0 0.0
    %365 = vmatprep.subr.mxu0 0.0
    %366 = vmatpush1.msra.mxu0 0.0
    %367 = vmatprep.subr.mxu0 0.0
    %368 = vmatpush1.msra.mxu0 0.0
    %369 = vmatprep.subr.mxu0 0.0
    %370 = vmatpush1.msra.mxu0 0.0
    %371 = vmatprep.mubr.f32.mxu0 0.0
    %372 = vmatmul.mubr.f32.gmra.mrb[0].mxu0 %v282
    %v373 = vpop.f32.mrb[0].mxu0
    %v374 = vadd.f32 %v305, %v373
    %v375 = vpop.f32.mrb[0].mxu0
    %376 = vmatprep.mubr.f32.mxu0 0.0
    %377 = vmatmul.mubr.f32.gmra.mrb[0].mxu0 %v283
    %v378 = vpop.f32.mrb[0].mxu0
    %v379 = vadd.f32 %v305, %v378
    %v380 = vpop.f32.mrb[0].mxu0
    %381 = vdwg.mxu0
    %382 = vst [vmem:[#allocation10] sm:$0xff] %v374
    %383 = vst [vmem:[#allocation10 + $0x8] sm:$0xff] %v379
    // Predicated region
    $region46: #{tpu_custom_call.1} parent=1 // pred_check
      _
    $region47: #{tpu_custom_call.1} parent=1 // pred_check_branch
      %385 = sbr.rel (0) target = $region49
    $region48: #{tpu_custom_call.1} parent=1 // pred_region
      %s387 = ssub.s32 256, 256
      %388 = vsyncadd [#allocation4], %s387
      %s389 = sshll.u32 [#allocation10], 4
      %s390 = int_to_ptr.vmem [resolvable:$true] %s389
      %395 = dma.vmem_to_hbm [thread:$0]  %s390, 256, %s7, [#allocation4], 128, 128, 8
    $region49: #{tpu_custom_call.1} parent=1 // pred_fallthru
      _
    // Predicated region
    $region50: #{tpu_custom_call.1} parent=1 // pred_check
      _
    $region51: #{tpu_custom_call.1} parent=1 // pred_check_branch
      %397 = sbr.rel (0) target = $region53
    $region52: #{tpu_custom_call.1} parent=1 // pred_region
      %398 = dma.done [#allocation4], 256
    $region53: #{tpu_custom_call.1} parent=1 // pred_fallthru
      _
    %399 = vsyncpa [#allocation3], 1
    %400 = vsyncpa [#allocation6], 1
    %401 = vsyncpa [#allocation9], 1
    %402 = vsyncpa [#allocation4], 1

</llo_original>
